<compile_context>
chip_gen: v5e
topology: v5e:2x2
jax: 0.10.0
libtpu: 0.0.40
codegen_flags: <defaults>
</compile_context>

<pallas_src>
import functools

import jax
import jax.numpy as jnp
from jax import lax
from jax.experimental import pallas as pl
from jax.experimental.pallas import tpu as pltpu  # noqa: F401  (CompilerParams / vmem_limit hook for larger shapes)

BN_EPS = 1e-5
LANE = 128      # last-dim (lane) granule
SUBLANE = 8     # second-to-last (sublane) granule for f32


def _round_up(n, m):
    return ((n + m - 1) // m) * m


def _pad2d(a, rows, cols):
    return jnp.pad(a, ((0, rows - a.shape[0]), (0, cols - a.shape[1])))


def _textdnn_kernel(x_ref,
                    w1_ref, gb1_ref,
                    w2_ref, gb2_ref,
                    w3_ref, gb3_ref,
                    o_ref,
                    *, batch, mask_rows):
    """Fused 3x (Linear[no bias] -> BatchNorm1d(train) -> ReLU), fully resident."""
    inv_b = jnp.float32(1.0 / batch)

    if mask_rows:
        row_ids = lax.broadcasted_iota(jnp.int32, (x_ref.shape[0], 1), 0)
        row_mask = (row_ids < batch).astype(jnp.float32)

    def layer(h, w_ref, gb_ref):
        # Linear: bf16 MXU matmul, f32 accumulation. Bias is algebraically dead
        # under training-mode BN (cancelled by the mean subtraction) -> dropped.
        y = jnp.dot(h.astype(jnp.bfloat16), w_ref[...],
                    preferred_element_type=jnp.float32)

        # One-pass batch stats (training-mode BN, biased variance), f32.
        mean = jnp.sum(y, axis=0, keepdims=True) * inv_b
        mean_sq = jnp.sum(y * y, axis=0, keepdims=True) * inv_b
        var = jnp.maximum(mean_sq - mean * mean, 0.0)

        gamma = gb_ref[0:1, :]
        beta = gb_ref[1:2, :]
        scale = gamma * lax.rsqrt(var + BN_EPS)   # fold BN into a single FMA
        shift = beta - mean * scale

        h_out = jnp.maximum(y * scale + shift, 0.0)
        if mask_rows:
            # Keep zero-padded batch rows inert for the next layer's statistics.
            h_out = h_out * row_mask
        return h_out

    h = x_ref[...]
    h = layer(h, w1_ref, gb1_ref)
    h = layer(h, w2_ref, gb2_ref)
    h = layer(h, w3_ref, gb3_ref)
    o_ref[...] = h.astype(o_ref.dtype)


def textdnn_forward(x, params):
    """x: [B, input_dim] f32.  params: dict from init_params (PyTorch-like)."""
    B, input_dim = x.shape
    hidden_dim = params["w1"].shape[1]
    output_dim = params["w3"].shape[1]

    b_pad = _round_up(B, SUBLANE)
    in_pad = _round_up(input_dim, LANE)
    hid_pad = _round_up(hidden_dim, LANE)
    out_pad = _round_up(output_dim, LANE)

    # Pad activations/weights to lane-dense shapes; weights DMAed as bf16.
    x_p = _pad2d(x.astype(jnp.float32), b_pad, in_pad)
    w1 = _pad2d(params["w1"], in_pad, hid_pad).astype(jnp.bfloat16)
    w2 = _pad2d(params["w2"], hid_pad, hid_pad).astype(jnp.bfloat16)
    w3 = _pad2d(params["w3"], hid_pad, out_pad).astype(jnp.bfloat16)
    # Pack gamma/beta per layer into one [2, F] f32 operand (fewer DMAs).
    gb1 = _pad2d(jnp.stack([params["g1"], params["bt1"]]), 2, hid_pad)
    gb2 = _pad2d(jnp.stack([params["g2"], params["bt2"]]), 2, hid_pad)
    gb3 = _pad2d(jnp.stack([params["g3"], params["bt3"]]), 2, out_pad)

    operands = (x_p, w1, gb1, w2, gb2, w3, gb3)

    def full_spec(shape):
        return pl.BlockSpec(shape, lambda shape=shape: (0,) * len(shape))

    flops = 2 * b_pad * (in_pad * hid_pad + hid_pad * hid_pad + hid_pad * out_pad)
    transcendentals = 2 * hid_pad + out_pad  # one rsqrt per feature per layer
    bytes_accessed = int(sum(int(a.size) * a.dtype.itemsize for a in operands)
                         + b_pad * out_pad * 4)
    cost = pl.CostEstimate(flops=int(flops),
                           transcendentals=int(transcendentals),
                           bytes_accessed=bytes_accessed)

    kernel = functools.partial(_textdnn_kernel, batch=B, mask_rows=(b_pad != B))

    y_pad = pl.pallas_call(
        kernel,
        out_shape=jax.ShapeDtypeStruct((b_pad, out_pad), jnp.float32),
        grid=(),
        in_specs=[full_spec(a.shape) for a in operands],
        out_specs=full_spec((b_pad, out_pad)),
        cost_estimate=cost,
    )(*operands)

    return y_pad[:B, :output_dim]


def init_params(key, input_dim, hidden_dim, output_dim):
    """Deterministic init mimicking nn.Linear / nn.BatchNorm1d defaults.

    Linear weights stored pre-transposed: [in_features, out_features].
    Biases are kept for the reference (they cancel under training-mode BN,
    so the kernel never loads them).  gamma=1, beta=0 (PyTorch defaults).
    """
    ks = jax.random.split(key, 6)

    def linear(kw, kb, fan_in, fan_out):
        bound = 1.0 / jnp.sqrt(jnp.float32(fan_in))
        w = jax.random.uniform(kw, (fan_in, fan_out), jnp.float32, -bound, bound)
        b = jax.random.uniform(kb, (fan_out,), jnp.float32, -bound, bound)
        return w, b

    w1, b1 = linear(ks[0], ks[1], input_dim, hidden_dim)
    w2, b2 = linear(ks[2], ks[3], hidden_dim, hidden_dim)
    w3, b3 = linear(ks[4], ks[5], hidden_dim, output_dim)

    return {
        "w1": w1, "b1": b1,
        "g1": jnp.ones((hidden_dim,), jnp.float32),
        "bt1": jnp.zeros((hidden_dim,), jnp.float32),
        "w2": w2, "b2": b2,
        "g2": jnp.ones((hidden_dim,), jnp.float32),
        "bt2": jnp.zeros((hidden_dim,), jnp.float32),
        "w3": w3, "b3": b3,
        "g3": jnp.ones((output_dim,), jnp.float32),
        "bt3": jnp.zeros((output_dim,), jnp.float32),
    }


def _reference(x, p):
    """Pure-JAX reference with full PyTorch training-mode semantics
    (including linear bias, two-pass BN), using the same bf16 matmul precision
    as the kernel so the comparison is apples-to-apples."""
    def layer(h, w, b, g, bt):
        y = jnp.dot(h.astype(jnp.bfloat16), w.astype(jnp.bfloat16),
                    preferred_element_type=jnp.float32) + b
        mean = jnp.mean(y, axis=0, keepdims=True)
        var = jnp.mean((y - mean) ** 2, axis=0, keepdims=True)
        return jnp.maximum((y - mean) / jnp.sqrt(var + BN_EPS) * g + bt, 0.0)

    h = layer(x, p["w1"], p["b1"], p["g1"], p["bt1"])
    h = layer(h, p["w2"], p["b2"], p["g2"], p["bt2"])
    h = layer(h, p["w3"], p["b3"], p["g3"], p["bt3"])
    return h


if __name__ == "__main__":
    input_dim, hidden_dim, output_dim = 16, 32, 8
    batch = 8

    key = jax.random.PRNGKey(0)
    kx, kp = jax.random.split(key)
    x = jax.random.normal(kx, (batch, input_dim), jnp.float32)
    params = init_params(kp, input_dim, hidden_dim, output_dim)

    out = textdnn_forward(x, params)
    out = jax.block_until_ready(out)

    ref = _reference(x, params)
    assert out.shape == (batch, output_dim)
    # bf16 matmul path + folded-BN reordering -> compare at bf16-appropriate tol.
    assert jnp.allclose(out, ref, atol=5e-3, rtol=5e-3), "mismatch vs reference"

    print("KERNEL_OK")
</pallas_src>

<mosaic_0001>
module attributes {stable_mosaic.version = 11 : i64} {
  func.func @_textdnn_kernel(%arg0: memref<8x128xf32, #tpu.memory_space<vmem>>, %arg1: memref<128x128xbf16, #tpu.memory_space<vmem>>, %arg2: memref<2x128xf32, #tpu.memory_space<vmem>>, %arg3: memref<128x128xbf16, #tpu.memory_space<vmem>>, %arg4: memref<2x128xf32, #tpu.memory_space<vmem>>, %arg5: memref<128x128xbf16, #tpu.memory_space<vmem>>, %arg6: memref<2x128xf32, #tpu.memory_space<vmem>>, %arg7: memref<8x128xf32, #tpu.memory_space<vmem>>) attributes {dimension_semantics = [], scalar_prefetch = 0 : i64, scratch_operands = 0 : i64, tpu.core_type = #tpu.core_type<tc>} {
    %c0 = arith.constant 0 : index
    %c0_0 = arith.constant 0 : index
    %0 = vector.load %arg0[%c0, %c0_0] : memref<8x128xf32, #tpu.memory_space<vmem>>, vector<8x128xf32>
    %1 = arith.truncf %0 : vector<8x128xf32> to vector<8x128xbf16>
    %c0_1 = arith.constant 0 : index
    %c0_2 = arith.constant 0 : index
    %2 = vector.load %arg1[%c0_1, %c0_2] : memref<128x128xbf16, #tpu.memory_space<vmem>>, vector<128x128xbf16>
    %cst = arith.constant dense<0.000000e+00> : vector<8x128xf32>
    %3 = tpu.matmul %1, %2, %cst {dimension_numbers = #tpu.dot_dimension_numbers<[1], [0], [0], [1], [0, 0, 1, 1], [], []>} : vector<8x128xbf16>, vector<128x128xbf16>, vector<8x128xf32> -> vector<8x128xf32>
    %cst_3 = arith.constant dense<0.000000e+00> : vector<128xf32>
    %4 = vector.multi_reduction <add>, %3, %cst_3 [0] : vector<8x128xf32> to vector<128xf32>
    %5 = vector.shape_cast %4 : vector<128xf32> to vector<1x128xf32>
    %cst_4 = arith.constant 1.250000e-01 : f32
    %6 = vector.broadcast %cst_4 : f32 to vector<1x128xf32>
    %7 = arith.mulf %5, %6 : vector<1x128xf32>
    %8 = arith.mulf %3, %3 : vector<8x128xf32>
    %cst_5 = arith.constant dense<0.000000e+00> : vector<128xf32>
    %9 = vector.multi_reduction <add>, %8, %cst_5 [0] : vector<8x128xf32> to vector<128xf32>
    %10 = vector.shape_cast %9 : vector<128xf32> to vector<1x128xf32>
    %cst_6 = arith.constant 1.250000e-01 : f32
    %11 = vector.broadcast %cst_6 : f32 to vector<1x128xf32>
    %12 = arith.mulf %10, %11 : vector<1x128xf32>
    %13 = arith.mulf %7, %7 : vector<1x128xf32>
    %14 = arith.subf %12, %13 : vector<1x128xf32>
    %cst_7 = arith.constant 0.000000e+00 : f32
    %15 = vector.broadcast %cst_7 : f32 to vector<1x128xf32>
    %16 = arith.maximumf %14, %15 : vector<1x128xf32>
    %c0_8 = arith.constant 0 : index
    %c0_9 = arith.constant 0 : index
    %17 = vector.load %arg2[%c0_8, %c0_9] : memref<2x128xf32, #tpu.memory_space<vmem>>, vector<1x128xf32>
    %c1 = arith.constant 1 : index
    %c0_10 = arith.constant 0 : index
    %18 = vector.load %arg2[%c1, %c0_10] : memref<2x128xf32, #tpu.memory_space<vmem>>, vector<1x128xf32>
    %cst_11 = arith.constant 9.99999974E-6 : f32
    %19 = vector.broadcast %cst_11 : f32 to vector<1x128xf32>
    %20 = arith.addf %16, %19 : vector<1x128xf32>
    %21 = math.rsqrt %20 : vector<1x128xf32>
    %22 = arith.mulf %17, %21 : vector<1x128xf32>
    %23 = arith.mulf %7, %22 : vector<1x128xf32>
    %24 = arith.subf %18, %23 : vector<1x128xf32>
    %25 = vector.broadcast %22 : vector<1x128xf32> to vector<8x128xf32>
    %26 = arith.mulf %3, %25 : vector<8x128xf32>
    %27 = vector.broadcast %24 : vector<1x128xf32> to vector<8x128xf32>
    %28 = arith.addf %26, %27 : vector<8x128xf32>
    %cst_12 = arith.constant 0.000000e+00 : f32
    %29 = vector.broadcast %cst_12 : f32 to vector<8x128xf32>
    %30 = arith.maximumf %28, %29 : vector<8x128xf32>
    %31 = arith.truncf %30 : vector<8x128xf32> to vector<8x128xbf16>
    %c0_13 = arith.constant 0 : index
    %c0_14 = arith.constant 0 : index
    %32 = vector.load %arg3[%c0_13, %c0_14] : memref<128x128xbf16, #tpu.memory_space<vmem>>, vector<128x128xbf16>
    %cst_15 = arith.constant dense<0.000000e+00> : vector<8x128xf32>
    %33 = tpu.matmul %31, %32, %cst_15 {dimension_numbers = #tpu.dot_dimension_numbers<[1], [0], [0], [1], [0, 0, 1, 1], [], []>} : vector<8x128xbf16>, vector<128x128xbf16>, vector<8x128xf32> -> vector<8x128xf32>
    %cst_16 = arith.constant dense<0.000000e+00> : vector<128xf32>
    %34 = vector.multi_reduction <add>, %33, %cst_16 [0] : vector<8x128xf32> to vector<128xf32>
    %35 = vector.shape_cast %34 : vector<128xf32> to vector<1x128xf32>
    %cst_17 = arith.constant 1.250000e-01 : f32
    %36 = vector.broadcast %cst_17 : f32 to vector<1x128xf32>
    %37 = arith.mulf %35, %36 : vector<1x128xf32>
    %38 = arith.mulf %33, %33 : vector<8x128xf32>
    %cst_18 = arith.constant dense<0.000000e+00> : vector<128xf32>
    %39 = vector.multi_reduction <add>, %38, %cst_18 [0] : vector<8x128xf32> to vector<128xf32>
    %40 = vector.shape_cast %39 : vector<128xf32> to vector<1x128xf32>
    %cst_19 = arith.constant 1.250000e-01 : f32
    %41 = vector.broadcast %cst_19 : f32 to vector<1x128xf32>
    %42 = arith.mulf %40, %41 : vector<1x128xf32>
    %43 = arith.mulf %37, %37 : vector<1x128xf32>
    %44 = arith.subf %42, %43 : vector<1x128xf32>
    %cst_20 = arith.constant 0.000000e+00 : f32
    %45 = vector.broadcast %cst_20 : f32 to vector<1x128xf32>
    %46 = arith.maximumf %44, %45 : vector<1x128xf32>
    %c0_21 = arith.constant 0 : index
    %c0_22 = arith.constant 0 : index
    %47 = vector.load %arg4[%c0_21, %c0_22] : memref<2x128xf32, #tpu.memory_space<vmem>>, vector<1x128xf32>
    %c1_23 = arith.constant 1 : index
    %c0_24 = arith.constant 0 : index
    %48 = vector.load %arg4[%c1_23, %c0_24] : memref<2x128xf32, #tpu.memory_space<vmem>>, vector<1x128xf32>
    %cst_25 = arith.constant 9.99999974E-6 : f32
    %49 = vector.broadcast %cst_25 : f32 to vector<1x128xf32>
    %50 = arith.addf %46, %49 : vector<1x128xf32>
    %51 = math.rsqrt %50 : vector<1x128xf32>
    %52 = arith.mulf %47, %51 : vector<1x128xf32>
    %53 = arith.mulf %37, %52 : vector<1x128xf32>
    %54 = arith.subf %48, %53 : vector<1x128xf32>
    %55 = vector.broadcast %52 : vector<1x128xf32> to vector<8x128xf32>
    %56 = arith.mulf %33, %55 : vector<8x128xf32>
    %57 = vector.broadcast %54 : vector<1x128xf32> to vector<8x128xf32>
    %58 = arith.addf %56, %57 : vector<8x128xf32>
    %cst_26 = arith.constant 0.000000e+00 : f32
    %59 = vector.broadcast %cst_26 : f32 to vector<8x128xf32>
    %60 = arith.maximumf %58, %59 : vector<8x128xf32>
    %61 = arith.truncf %60 : vector<8x128xf32> to vector<8x128xbf16>
    %c0_27 = arith.constant 0 : index
    %c0_28 = arith.constant 0 : index
    %62 = vector.load %arg5[%c0_27, %c0_28] : memref<128x128xbf16, #tpu.memory_space<vmem>>, vector<128x128xbf16>
    %cst_29 = arith.constant dense<0.000000e+00> : vector<8x128xf32>
    %63 = tpu.matmul %61, %62, %cst_29 {dimension_numbers = #tpu.dot_dimension_numbers<[1], [0], [0], [1], [0, 0, 1, 1], [], []>} : vector<8x128xbf16>, vector<128x128xbf16>, vector<8x128xf32> -> vector<8x128xf32>
    %cst_30 = arith.constant dense<0.000000e+00> : vector<128xf32>
    %64 = vector.multi_reduction <add>, %63, %cst_30 [0] : vector<8x128xf32> to vector<128xf32>
    %65 = vector.shape_cast %64 : vector<128xf32> to vector<1x128xf32>
    %cst_31 = arith.constant 1.250000e-01 : f32
    %66 = vector.broadcast %cst_31 : f32 to vector<1x128xf32>
    %67 = arith.mulf %65, %66 : vector<1x128xf32>
    %68 = arith.mulf %63, %63 : vector<8x128xf32>
    %cst_32 = arith.constant dense<0.000000e+00> : vector<128xf32>
    %69 = vector.multi_reduction <add>, %68, %cst_32 [0] : vector<8x128xf32> to vector<128xf32>
    %70 = vector.shape_cast %69 : vector<128xf32> to vector<1x128xf32>
    %cst_33 = arith.constant 1.250000e-01 : f32
    %71 = vector.broadcast %cst_33 : f32 to vector<1x128xf32>
    %72 = arith.mulf %70, %71 : vector<1x128xf32>
    %73 = arith.mulf %67, %67 : vector<1x128xf32>
    %74 = arith.subf %72, %73 : vector<1x128xf32>
    %cst_34 = arith.constant 0.000000e+00 : f32
    %75 = vector.broadcast %cst_34 : f32 to vector<1x128xf32>
    %76 = arith.maximumf %74, %75 : vector<1x128xf32>
    %c0_35 = arith.constant 0 : index
    %c0_36 = arith.constant 0 : index
    %77 = vector.load %arg6[%c0_35, %c0_36] : memref<2x128xf32, #tpu.memory_space<vmem>>, vector<1x128xf32>
    %c1_37 = arith.constant 1 : index
    %c0_38 = arith.constant 0 : index
    %78 = vector.load %arg6[%c1_37, %c0_38] : memref<2x128xf32, #tpu.memory_space<vmem>>, vector<1x128xf32>
    %cst_39 = arith.constant 9.99999974E-6 : f32
    %79 = vector.broadcast %cst_39 : f32 to vector<1x128xf32>
    %80 = arith.addf %76, %79 : vector<1x128xf32>
    %81 = math.rsqrt %80 : vector<1x128xf32>
    %82 = arith.mulf %77, %81 : vector<1x128xf32>
    %83 = arith.mulf %67, %82 : vector<1x128xf32>
    %84 = arith.subf %78, %83 : vector<1x128xf32>
    %85 = vector.broadcast %82 : vector<1x128xf32> to vector<8x128xf32>
    %86 = arith.mulf %63, %85 : vector<8x128xf32>
    %87 = vector.broadcast %84 : vector<1x128xf32> to vector<8x128xf32>
    %88 = arith.addf %86, %87 : vector<8x128xf32>
    %cst_40 = arith.constant 0.000000e+00 : f32
    %89 = vector.broadcast %cst_40 : f32 to vector<8x128xf32>
    %90 = arith.maximumf %88, %89 : vector<8x128xf32>
    %c0_41 = arith.constant 0 : index
    %c0_42 = arith.constant 0 : index
    %91 = vector.load %arg7[%c0_41, %c0_42] : memref<8x128xf32, #tpu.memory_space<vmem>>, vector<8x128xf32>
    tpu.vector_store %arg7[%c0_41, %c0_42], %90 {strides = array<i32>} : memref<8x128xf32, #tpu.memory_space<vmem>>, vector<8x128xf32>,
    return
  }
}

</mosaic_0001>

<llo_original>
// kernel: tpu_custom_call.1
$region0: #{tpu_custom_call.1}
  #allocation0 [shape = 'u32[]', space=smem, size = 0x4, offset = 0x4, fixed_abs, tag = 'smem constant byte address 0x4 - core index']
  #allocation1 [shape = 'u32[72,128]{1,0:T(1,128)}', space=vmem, size = 0x9000, scoped, tag = 'internal scratch']
  %s0 = inlined_call_operand.hbm [shape: f32[8,128], index: 0, kind: input, shape index: {}]
  %s1 = inlined_call_operand.hbm [shape: bf16[128,128], index: 1, kind: input, shape index: {}]
  %s2 = inlined_call_operand.hbm [shape: f32[2,128], index: 2, kind: input, shape index: {}]
  %s3 = inlined_call_operand.hbm [shape: bf16[128,128], index: 3, kind: input, shape index: {}]
  %s4 = inlined_call_operand.vmem [shape: f32[2,128], index: 4, kind: input, shape index: {}]
  %s5 = inlined_call_operand.hbm [shape: bf16[128,128], index: 5, kind: input, shape index: {}]
  %s6 = inlined_call_operand.vmem [shape: f32[2,128], index: 6, kind: input, shape index: {}]
  %s7 = inlined_call_operand.hbm [shape: f32[8,128], index: 7, kind: output, shape index: {}]
  %s8 = sld [smem:[#allocation0]]
  $region58: #{tpu_custom_call.1} parent=0
    _
  %s10 = ssub.s32 1, %s8
  %s11 = scalar_select 0, %s10, %s8
  $region1: #{tpu_custom_call.1} parent=0
    #allocation2 [shape = 'u8[4096]{0}', space=vmem, size = 0x1000, scoped, tag = 'input window, operand 0, single buffered']
    #allocation3 [shape = 's32[1]{0}', space=sflag, size = 0x4, scoped, tag = 'scoped memory for tpu_custom_call.1']
    #allocation4 [shape = 's32[1]{0}', space=sflag, size = 0x4, scoped, tag = 'scoped memory for tpu_custom_call.1']
    #allocation5 [shape = 'u8[32768]{0}', space=vmem, size = 0x8000, scoped, tag = 'input window, operand 1, single buffered']
    #allocation6 [shape = 's32[1]{0}', space=sflag, size = 0x4, scoped, tag = 'scoped memory for tpu_custom_call.1']
    #allocation7 [shape = 'u8[1024]{0}', space=vmem, size = 0x400, scoped, tag = 'input window, operand 2, single buffered']
    #allocation8 [shape = 'u8[32768]{0}', space=vmem, size = 0x8000, scoped, tag = 'input window, operand 3, single buffered']
    #allocation9 [shape = 's32[1]{0}', space=sflag, size = 0x4, scoped, tag = 'scoped memory for tpu_custom_call.1']
    #allocation10 [shape = 'u8[32768]{0}', space=vmem, size = 0x8000, scoped, tag = 'input window, operand 5, single buffered']
    #allocation11 [shape = 'u8[4096]{0}', space=vmem, size = 0x1000, scoped, tag = 'output window, operand 0, single buffered']
    %12 = vsyncpa [#allocation3], 0
    %13 = vsyncpa [#allocation6], 0
    %14 = vsyncpa [#allocation9], 0
    %15 = vsyncpa [#allocation4], 0
    // Predicated region
    $region2: #{tpu_custom_call.1} parent=1 // pred_check
      _
    $region3: #{tpu_custom_call.1} parent=1 // pred_check_branch
      %17 = sbr.rel (0) target = $region5
    $region4: #{tpu_custom_call.1} parent=1 // pred_region
      %19 = vsyncadd [#allocation3], 0
      %s21 = sshll.u32 %s0, 4
      %s22 = int_to_ptr.hbm [resolvable:$true] %s21
      %s23 = sshll.u32 [#allocation2], 4
      %s24 = int_to_ptr.vmem [resolvable:$true] %s23
      %26 = dma.hbm_to_vmem [thread:$0]  %s22, 128, %s24, [#allocation3]
    $region5: #{tpu_custom_call.1} parent=1 // pred_fallthru
      _
    // Predicated region
    $region6: #{tpu_custom_call.1} parent=1 // pred_check
      _
    $region7: #{tpu_custom_call.1} parent=1 // pred_check_branch
      %28 = sbr.rel (0) target = $region9
    $region8: #{tpu_custom_call.1} parent=1 // pred_region
      %30 = vsyncadd [#allocation6], 0
      %s31 = sshll.u32 %s1, 4
      %s32 = int_to_ptr.hbm [resolvable:$true] %s31
      %s33 = sshll.u32 [#allocation5], 4
      %s34 = int_to_ptr.vmem [resolvable:$true] %s33
      %39 = dma.hbm_to_vmem [thread:$0]  %s32, 1024, %s34, [#allocation6], 64, 64, 4
    $region9: #{tpu_custom_call.1} parent=1 // pred_fallthru
      _
    // Predicated region
    $region10: #{tpu_custom_call.1} parent=1 // pred_check
      _
    $region11: #{tpu_custom_call.1} parent=1 // pred_check_branch
      %41 = sbr.rel (0) target = $region13
    $region12: #{tpu_custom_call.1} parent=1 // pred_region
      %43 = vsyncadd [#allocation6], 0
      %s45 = sshll.u32 %s2, 4
      %s46 = int_to_ptr.hbm [resolvable:$true] %s45
      %s47 = sshll.u32 [#allocation7], 4
      %s48 = int_to_ptr.vmem [resolvable:$true] %s47
      %50 = dma.hbm_to_vmem [thread:$0]  %s46, 32, %s48, [#allocation6]
    $region13: #{tpu_custom_call.1} parent=1 // pred_fallthru
      _
    // Predicated region
    $region14: #{tpu_custom_call.1} parent=1 // pred_check
      _
    $region15: #{tpu_custom_call.1} parent=1 // pred_check_branch
      %52 = sbr.rel (0) target = $region17
    $region16: #{tpu_custom_call.1} parent=1 // pred_region
      %54 = vsyncadd [#allocation9], 0
      %s55 = sshll.u32 %s3, 4
      %s56 = int_to_ptr.hbm [resolvable:$true] %s55
      %s57 = sshll.u32 [#allocation8], 4
      %s58 = int_to_ptr.vmem [resolvable:$true] %s57
      %63 = dma.hbm_to_vmem [thread:$0]  %s56, 1024, %s58, [#allocation9], 64, 64, 4
    $region17: #{tpu_custom_call.1} parent=1 // pred_fallthru
      _
    // Predicated region
    $region18: #{tpu_custom_call.1} parent=1 // pred_check
      _
    $region19: #{tpu_custom_call.1} parent=1 // pred_check_branch
      %65 = sbr.rel (0) target = $region21
    $region20: #{tpu_custom_call.1} parent=1 // pred_region
      _
    $region21: #{tpu_custom_call.1} parent=1 // pred_fallthru
      _
    // Predicated region
    $region22: #{tpu_custom_call.1} parent=1 // pred_check
      _
    $region23: #{tpu_custom_call.1} parent=1 // pred_check_branch
      %67 = sbr.rel (0) target = $region25
    $region24: #{tpu_custom_call.1} parent=1 // pred_region
      %69 = vsyncadd [#allocation9], 0
      %s70 = sshll.u32 %s5, 4
      %s71 = int_to_ptr.hbm [resolvable:$true] %s70
      %s72 = sshll.u32 [#allocation10], 4
      %s73 = int_to_ptr.vmem [resolvable:$true] %s72
      %78 = dma.hbm_to_vmem [thread:$0]  %s71, 1024, %s73, [#allocation9], 64, 64, 4
    $region25: #{tpu_custom_call.1} parent=1 // pred_fallthru
      _
    // Predicated region
    $region26: #{tpu_custom_call.1} parent=1 // pred_check
      _
    $region27: #{tpu_custom_call.1} parent=1 // pred_check_branch
      %80 = sbr.rel (0) target = $region29
    $region28: #{tpu_custom_call.1} parent=1 // pred_region
      _
    $region29: #{tpu_custom_call.1} parent=1 // pred_fallthru
      _
    // Predicated region
    $region30: #{tpu_custom_call.1} parent=1 // pred_check
      _
    $region31: #{tpu_custom_call.1} parent=1 // pred_check_branch
      %82 = sbr.rel (0) target = $region33
    $region32: #{tpu_custom_call.1} parent=1 // pred_region
      %84 = dma.done [#allocation3], 128
    $region33: #{tpu_custom_call.1} parent=1 // pred_fallthru
      _
    // Predicated region
    $region34: #{tpu_custom_call.1} parent=1 // pred_check
      _
    $region35: #{tpu_custom_call.1} parent=1 // pred_check_branch
      %86 = sbr.rel (0) target = $region37
    $region36: #{tpu_custom_call.1} parent=1 // pred_region
      %88 = dma.done [#allocation6], 1024
    $region37: #{tpu_custom_call.1} parent=1 // pred_fallthru
      _
    // Predicated region
    $region38: #{tpu_custom_call.1} parent=1 // pred_check
      _
    $region39: #{tpu_custom_call.1} parent=1 // pred_check_branch
      %90 = sbr.rel (0) target = $region41
    $region40: #{tpu_custom_call.1} parent=1 // pred_region
      %92 = dma.done [#allocation6], 32
    $region41: #{tpu_custom_call.1} parent=1 // pred_fallthru
      _
    // Predicated region
    $region42: #{tpu_custom_call.1} parent=1 // pred_check
      _
    $region43: #{tpu_custom_call.1} parent=1 // pred_check_branch
      %94 = sbr.rel (0) target = $region45
    $region44: #{tpu_custom_call.1} parent=1 // pred_region
      %96 = dma.done [#allocation9], 1024
    $region45: #{tpu_custom_call.1} parent=1 // pred_fallthru
      _
    // Predicated region
    $region46: #{tpu_custom_call.1} parent=1 // pred_check
      _
    $region47: #{tpu_custom_call.1} parent=1 // pred_check_branch
      %98 = sbr.rel (0) target = $region49
    $region48: #{tpu_custom_call.1} parent=1 // pred_region
      %100 = dma.done [#allocation9], 1024
    $region49: #{tpu_custom_call.1} parent=1 // pred_fallthru
      _
    %v101 = vld [vmem:[#allocation2] sm:$0xff]
    %v102 = vpack.c.bf16 %v101, %v101
    %v103 = vld [vmem:[#allocation5] sm:$0xf]
    %v104 = vld [vmem:[#allocation5 + $0x4] sm:$0xf]
    %v105 = vld [vmem:[#allocation5 + $0x8] sm:$0xf]
    %v106 = vld [vmem:[#allocation5 + $0xc] sm:$0xf]
    %v107 = vld [vmem:[#allocation5 + $0x10] sm:$0xf]
    %v108 = vld [vmem:[#allocation5 + $0x14] sm:$0xf]
    %v109 = vld [vmem:[#allocation5 + $0x18] sm:$0xf]
    %v110 = vld [vmem:[#allocation5 + $0x1c] sm:$0xf]
    %v111 = vld [vmem:[#allocation5 + $0x20] sm:$0xf]
    %v112 = vld [vmem:[#allocation5 + $0x24] sm:$0xf]
    %v113 = vld [vmem:[#allocation5 + $0x28] sm:$0xf]
    %v114 = vld [vmem:[#allocation5 + $0x2c] sm:$0xf]
    %v115 = vld [vmem:[#allocation5 + $0x30] sm:$0xf]
    %v116 = vld [vmem:[#allocation5 + $0x34] sm:$0xf]
    %v117 = vld [vmem:[#allocation5 + $0x38] sm:$0xf]
    %v118 = vld [vmem:[#allocation5 + $0x3c] sm:$0xf]
    %v135 = vunpack.c.l.b16 %v103
    %v136 = vunpack.c.l.b16 %v104
    %v137 = vunpack.c.l.b16 %v105
    %v138 = vunpack.c.l.b16 %v106
    %v139 = vunpack.c.l.b16 %v107
    %v140 = vunpack.c.l.b16 %v108
    %v141 = vunpack.c.l.b16 %v109
    %v142 = vunpack.c.l.b16 %v110
    %v143 = vunpack.c.l.b16 %v111
    %v144 = vunpack.c.l.b16 %v112
    %v145 = vunpack.c.l.b16 %v113
    %v146 = vunpack.c.l.b16 %v114
    %v147 = vunpack.c.l.b16 %v115
    %v148 = vunpack.c.l.b16 %v116
    %v149 = vunpack.c.l.b16 %v117
    %v150 = vunpack.c.l.b16 %v118
    %v151 = vpack.c.b16 %v136, %v135
    %v152 = vpack.c.b16 %v138, %v137
    %v153 = vpack.c.b16 %v140, %v139
    %v154 = vpack.c.b16 %v142, %v141
    %v155 = vpack.c.b16 %v144, %v143
    %v156 = vpack.c.b16 %v146, %v145
    %v157 = vpack.c.b16 %v148, %v147
    %v158 = vpack.c.b16 %v150, %v149
    %167 = vmatpush.bf16.msra.mxu0 %v158
    %168 = vmatpush.bf16.msra.mxu0 %v157
    %169 = vmatpush.bf16.msra.mxu0 %v156
    %170 = vmatpush.bf16.msra.mxu0 %v155
    %171 = vmatpush.bf16.msra.mxu0 %v154
    %172 = vmatpush.bf16.msra.mxu0 %v153
    %173 = vmatpush.bf16.msra.mxu0 %v152
    %174 = vmatpush.bf16.msra.mxu0 %v151
    %175 = vmatmul.bf16.gmra.mxu0 %v102
    %v176 = vpop.f32.mrf.mxu0
    %v177 = vadd.f32 0.0, %v176
    %v178 = vpop.f32.mrf.mxu0
    %179 = vdwg.mxu0
    %v180 = vrot.slane %v177, 4
    %v181 = vadd.f32 %v177, %v180
    %v182 = vrot.slane %v181, 2
    %v183 = vadd.f32 %v181, %v182
    %v184 = vrot.slane %v183, 1
    %v185 = vadd.f32 %v183, %v184
    %v186 = vmul.f32 %v185, 0.125
    %v187 = vmul.f32 %v177, %v177
    %v188 = vrot.slane %v187, 4
    %v189 = vadd.f32 %v187, %v188
    %v190 = vrot.slane %v189, 2
    %v191 = vadd.f32 %v189, %v190
    %v192 = vrot.slane %v191, 1
    %v193 = vadd.f32 %v191, %v192
    %v194 = vmul.f32 %v193, 0.125
    %v195 = vmul.f32 %v186, %v186
    %v196 = vsub.f32 %v194, %v195
    %v197 = vmax.f32 %v196, 0.0
    %v198 = vld [vmem:[#allocation7] sm:$0x1]
    %v199 = vld [vmem:[#allocation7 + $0x1] sm:$0x1]
    %v200 = vadd.f32 %v197, 1e-05
    %v201 = vrsqrt.pop %v200
    %v202 = vmul.f32 %v201, %v200
    %v203 = vmul.f32 %v202, %v201
    %v204 = vmul.f32 0.5, %v203
    %v205 = vsub.f32 1.5, %v204
    %v206 = vmul.f32 %v201, %v205
    %vm207 = vweird.f32 %v200
    %vm208 = vweird.f32 %v201
    %vm209 = vmor %vm207, %vm208
    %v210 = vsel %vm209, %v201, %v206
    %v211 = vmul.f32 %v198, %v210
    %v212 = vmul.f32 %v186, %v211
    %v213 = vsub.f32 %v199, %v212
    %v214 = vperm.slane %v211, 0
    %v215 = vmul.f32 %v177, %v214
    %v216 = vperm.slane %v213, 0
    %v217 = vadd.f32 %v215, %v216
    %v218 = vmax.f32 %v217, 0.0
    %v219 = vpack.c.bf16 %v218, %v218
    %v220 = vld [vmem:[#allocation8] sm:$0xf]
    %v221 = vld [vmem:[#allocation8 + $0x4] sm:$0xf]
    %v222 = vld [vmem:[#allocation8 + $0x8] sm:$0xf]
    %v223 = vld [vmem:[#allocation8 + $0xc] sm:$0xf]
    %v224 = vld [vmem:[#allocation8 + $0x10] sm:$0xf]
    %v225 = vld [vmem:[#allocation8 + $0x14] sm:$0xf]
    %v226 = vld [vmem:[#allocation8 + $0x18] sm:$0xf]
    %v227 = vld [vmem:[#allocation8 + $0x1c] sm:$0xf]
    %v228 = vld [vmem:[#allocation8 + $0x20] sm:$0xf]
    %v229 = vld [vmem:[#allocation8 + $0x24] sm:$0xf]
    %v230 = vld [vmem:[#allocation8 + $0x28] sm:$0xf]
    %v231 = vld [vmem:[#allocation8 + $0x2c] sm:$0xf]
    %v232 = vld [vmem:[#allocation8 + $0x30] sm:$0xf]
    %v233 = vld [vmem:[#allocation8 + $0x34] sm:$0xf]
    %v234 = vld [vmem:[#allocation8 + $0x38] sm:$0xf]
    %v235 = vld [vmem:[#allocation8 + $0x3c] sm:$0xf]
    %v252 = vunpack.c.l.b16 %v220
    %v253 = vunpack.c.l.b16 %v221
    %v254 = vunpack.c.l.b16 %v222
    %v255 = vunpack.c.l.b16 %v223
    %v256 = vunpack.c.l.b16 %v224
    %v257 = vunpack.c.l.b16 %v225
    %v258 = vunpack.c.l.b16 %v226
    %v259 = vunpack.c.l.b16 %v227
    %v260 = vunpack.c.l.b16 %v228
    %v261 = vunpack.c.l.b16 %v229
    %v262 = vunpack.c.l.b16 %v230
    %v263 = vunpack.c.l.b16 %v231
    %v264 = vunpack.c.l.b16 %v232
    %v265 = vunpack.c.l.b16 %v233
    %v266 = vunpack.c.l.b16 %v234
    %v267 = vunpack.c.l.b16 %v235
    %v268 = vpack.c.b16 %v253, %v252
    %v269 = vpack.c.b16 %v255, %v254
    %v270 = vpack.c.b16 %v257, %v256
    %v271 = vpack.c.b16 %v259, %v258
    %v272 = vpack.c.b16 %v261, %v260
    %v273 = vpack.c.b16 %v263, %v262
    %v274 = vpack.c.b16 %v265, %v264
    %v275 = vpack.c.b16 %v267, %v266
    %284 = vmatpush.bf16.msra.mxu0 %v275
    %285 = vmatpush.bf16.msra.mxu0 %v274
    %286 = vmatpush.bf16.msra.mxu0 %v273
    %287 = vmatpush.bf16.msra.mxu0 %v272
    %288 = vmatpush.bf16.msra.mxu0 %v271
    %289 = vmatpush.bf16.msra.mxu0 %v270
    %290 = vmatpush.bf16.msra.mxu0 %v269
    %291 = vmatpush.bf16.msra.mxu0 %v268
    %292 = vmatmul.bf16.gmra.mxu0 %v219
    %v293 = vpop.f32.mrf.mxu0
    %v294 = vadd.f32 0.0, %v293
    %v295 = vpop.f32.mrf.mxu0
    %296 = vdwg.mxu0
    %v297 = vrot.slane %v294, 4
    %v298 = vadd.f32 %v294, %v297
    %v299 = vrot.slane %v298, 2
    %v300 = vadd.f32 %v298, %v299
    %v301 = vrot.slane %v300, 1
    %v302 = vadd.f32 %v300, %v301
    %v303 = vmul.f32 %v302, 0.125
    %v304 = vmul.f32 %v294, %v294
    %v305 = vrot.slane %v304, 4
    %v306 = vadd.f32 %v304, %v305
    %v307 = vrot.slane %v306, 2
    %v308 = vadd.f32 %v306, %v307
    %v309 = vrot.slane %v308, 1
    %v310 = vadd.f32 %v308, %v309
    %v311 = vmul.f32 %v310, 0.125
    %v312 = vmul.f32 %v303, %v303
    %v313 = vsub.f32 %v311, %v312
    %v314 = vmax.f32 %v313, 0.0
    %v315 = vld [vmem:[%s4] sm:$0x1]
    %v316 = vld [vmem:[%s4 + $0x1] sm:$0x1]
    %v317 = vadd.f32 %v314, 1e-05
    %v318 = vrsqrt.pop %v317
    %v319 = vmul.f32 %v318, %v317
    %v320 = vmul.f32 %v319, %v318
    %v321 = vmul.f32 0.5, %v320
    %v322 = vsub.f32 1.5, %v321
    %v323 = vmul.f32 %v318, %v322
    %vm324 = vweird.f32 %v317
    %vm325 = vweird.f32 %v318
    %vm326 = vmor %vm324, %vm325
    %v327 = vsel %vm326, %v318, %v323
    %v328 = vmul.f32 %v315, %v327
    %v329 = vmul.f32 %v303, %v328
    %v330 = vsub.f32 %v316, %v329
    %v331 = vperm.slane %v328, 0
    %v332 = vmul.f32 %v294, %v331
    %v333 = vperm.slane %v330, 0
    %v334 = vadd.f32 %v332, %v333
    %v335 = vmax.f32 %v334, 0.0
    %v336 = vpack.c.bf16 %v335, %v335
    %v337 = vld [vmem:[#allocation10] sm:$0xf]
    %v338 = vld [vmem:[#allocation10 + $0x4] sm:$0xf]
    %v339 = vld [vmem:[#allocation10 + $0x8] sm:$0xf]
    %v340 = vld [vmem:[#allocation10 + $0xc] sm:$0xf]
    %v341 = vld [vmem:[#allocation10 + $0x10] sm:$0xf]
    %v342 = vld [vmem:[#allocation10 + $0x14] sm:$0xf]
    %v343 = vld [vmem:[#allocation10 + $0x18] sm:$0xf]
    %v344 = vld [vmem:[#allocation10 + $0x1c] sm:$0xf]
    %v345 = vld [vmem:[#allocation10 + $0x20] sm:$0xf]
    %v346 = vld [vmem:[#allocation10 + $0x24] sm:$0xf]
    %v347 = vld [vmem:[#allocation10 + $0x28] sm:$0xf]
    %v348 = vld [vmem:[#allocation10 + $0x2c] sm:$0xf]
    %v349 = vld [vmem:[#allocation10 + $0x30] sm:$0xf]
    %v350 = vld [vmem:[#allocation10 + $0x34] sm:$0xf]
    %v351 = vld [vmem:[#allocation10 + $0x38] sm:$0xf]
    %v352 = vld [vmem:[#allocation10 + $0x3c] sm:$0xf]
    %v369 = vunpack.c.l.b16 %v337
    %v370 = vunpack.c.l.b16 %v338
    %v371 = vunpack.c.l.b16 %v339
    %v372 = vunpack.c.l.b16 %v340
    %v373 = vunpack.c.l.b16 %v341
    %v374 = vunpack.c.l.b16 %v342
    %v375 = vunpack.c.l.b16 %v343
    %v376 = vunpack.c.l.b16 %v344
    %v377 = vunpack.c.l.b16 %v345
    %v378 = vunpack.c.l.b16 %v346
    %v379 = vunpack.c.l.b16 %v347
    %v380 = vunpack.c.l.b16 %v348
    %v381 = vunpack.c.l.b16 %v349
    %v382 = vunpack.c.l.b16 %v350
    %v383 = vunpack.c.l.b16 %v351
    %v384 = vunpack.c.l.b16 %v352
    %v385 = vpack.c.b16 %v370, %v369
    %v386 = vpack.c.b16 %v372, %v371
    %v387 = vpack.c.b16 %v374, %v373
    %v388 = vpack.c.b16 %v376, %v375
    %v389 = vpack.c.b16 %v378, %v377
    %v390 = vpack.c.b16 %v380, %v379
    %v391 = vpack.c.b16 %v382, %v381
    %v392 = vpack.c.b16 %v384, %v383
    %401 = vmatpush.bf16.msra.mxu0 %v392
    %402 = vmatpush.bf16.msra.mxu0 %v391
    %403 = vmatpush.bf16.msra.mxu0 %v390
    %404 = vmatpush.bf16.msra.mxu0 %v389
    %405 = vmatpush.bf16.msra.mxu0 %v388
    %406 = vmatpush.bf16.msra.mxu0 %v387
    %407 = vmatpush.bf16.msra.mxu0 %v386
    %408 = vmatpush.bf16.msra.mxu0 %v385
    %409 = vmatmul.bf16.gmra.mxu0 %v336
    %v410 = vpop.f32.mrf.mxu0
    %v411 = vadd.f32 0.0, %v410
    %v412 = vpop.f32.mrf.mxu0
    %413 = vdwg.mxu0
    %v414 = vrot.slane %v411, 4
    %v415 = vadd.f32 %v411, %v414
    %v416 = vrot.slane %v415, 2
    %v417 = vadd.f32 %v415, %v416
    %v418 = vrot.slane %v417, 1
    %v419 = vadd.f32 %v417, %v418
    %v420 = vmul.f32 %v419, 0.125
    %v421 = vmul.f32 %v411, %v411
    %v422 = vrot.slane %v421, 4
    %v423 = vadd.f32 %v421, %v422
    %v424 = vrot.slane %v423, 2
    %v425 = vadd.f32 %v423, %v424
    %v426 = vrot.slane %v425, 1
    %v427 = vadd.f32 %v425, %v426
    %v428 = vmul.f32 %v427, 0.125
    %v429 = vmul.f32 %v420, %v420
    %v430 = vsub.f32 %v428, %v429
    %v431 = vmax.f32 %v430, 0.0
    %v432 = vld [vmem:[%s6] sm:$0x1]
    %v433 = vld [vmem:[%s6 + $0x1] sm:$0x1]
    %v434 = vadd.f32 %v431, 1e-05
    %v435 = vrsqrt.pop %v434
    %v436 = vmul.f32 %v435, %v434
    %v437 = vmul.f32 %v436, %v435
    %v438 = vmul.f32 0.5, %v437
    %v439 = vsub.f32 1.5, %v438
    %v440 = vmul.f32 %v435, %v439
    %vm441 = vweird.f32 %v434
    %vm442 = vweird.f32 %v435
    %vm443 = vmor %vm441, %vm442
    %v444 = vsel %vm443, %v435, %v440
    %v445 = vmul.f32 %v432, %v444
    %v446 = vmul.f32 %v420, %v445
    %v447 = vsub.f32 %v433, %v446
    %v448 = vperm.slane %v445, 0
    %v449 = vmul.f32 %v411, %v448
    %v450 = vperm.slane %v447, 0
    %v451 = vadd.f32 %v449, %v450
    %v452 = vmax.f32 %v451, 0.0
    %453 = vst [vmem:[#allocation11] sm:$0xff] %v452
    // Predicated region
    $region50: #{tpu_custom_call.1} parent=1 // pred_check
      _
    $region51: #{tpu_custom_call.1} parent=1 // pred_check_branch
      %455 = sbr.rel (0) target = $region53
    $region52: #{tpu_custom_call.1} parent=1 // pred_region
      %457 = vsyncadd [#allocation4], 0
      %s459 = sshll.u32 [#allocation11], 4
      %s460 = int_to_ptr.vmem [resolvable:$true] %s459
      %s461 = sshll.u32 %s7, 4
      %s462 = int_to_ptr.hbm [resolvable:$true] %s461
      %464 = dma.vmem_to_hbm [thread:$0]  %s460, 128, %s462, [#allocation4]
    $region53: #{tpu_custom_call.1} parent=1 // pred_fallthru
      _
    // Predicated region
    $region54: #{tpu_custom_call.1} parent=1 // pred_check
      _
    $region55: #{tpu_custom_call.1} parent=1 // pred_check_branch
      %466 = sbr.rel (0) target = $region57
    $region56: #{tpu_custom_call.1} parent=1 // pred_region
      %468 = dma.done [#allocation4], 128
    $region57: #{tpu_custom_call.1} parent=1 // pred_fallthru
      _
    %469 = vsyncpa [#allocation3], 1
    %470 = vsyncpa [#allocation6], 1
    %471 = vsyncpa [#allocation9], 1
    %472 = vsyncpa [#allocation4], 1

</llo_original>
